<compile_context>
chip_gen: v6e
topology: v6e:2x2x1
jax: 0.10.0
libtpu: 0.0.40
codegen_flags: <defaults>
</compile_context>

<pallas_src>
import functools

import jax
import jax.numpy as jnp
from jax.experimental import pallas as pl
from jax.experimental.pallas import tpu as pltpu

_EPS = 1e-5  # PyTorch InstanceNorm2d default


def _apply_act(y, act, slope):
    if act == "relu":
        return jnp.maximum(y, 0.0)
    if act == "leaky_relu":
        # PyTorch nn.LeakyReLU() default slope is 0.01 (configurable below).
        return jnp.where(y >= 0.0, y, slope * y)
    return y  # Identity


def _conv_kernel(x_ref, w_ref, y_ref, *maybe_stats, th, w_out, kq, cin4,
                 norm, act, slope):
    """Pass 1: stride-2 conv for one output-row tile of one image.

    x_ref: (1, Hq, Wq, 4*Cin)   space-to-depth packed padded image (whole image,
                                stays resident across the row-tile grid axis)
    w_ref: (kq, kq, 4*Cin, Cpad) repacked conv weight
    y_ref: (1, th*w_out, Cpad)  raw conv out (norm=True) or activated output
    norm=True extra outputs: per-image channel sum / sum-of-squares accumulators
    """
    t = pl.program_id(1)
    row0 = pl.multiple_of(t * th, th)
    # Packed rows needed for output rows [t*th, t*th + th): unit-stride window.
    xw = x_ref[0, pl.ds(row0, th + kq - 1), :, :]          # (th+kq-1, Wq, 4Cin)

    cpad = y_ref.shape[-1]
    acc = jnp.zeros((th * w_out, cpad), jnp.float32)
    for di in range(kq):
        for dj in range(kq):
            xs = xw[di:di + th, dj:dj + w_out, :]          # (th, w_out, 4Cin)
            acc = acc + jnp.dot(xs.reshape(th * w_out, cin4), w_ref[di, dj],
                                preferred_element_type=jnp.float32)

    if norm:
        sum_ref, sq_ref = maybe_stats
        y_ref[0] = acc                                     # raw conv (f32)

        @pl.when(t == 0)
        def _():
            sum_ref[...] = jnp.zeros_like(sum_ref)
            sq_ref[...] = jnp.zeros_like(sq_ref)

        # single-pass streaming statistics (E[x] and E[x^2])
        sum_ref[...] += jnp.sum(acc, axis=0, keepdims=True)[None]
        sq_ref[...] += jnp.sum(acc * acc, axis=0, keepdims=True)[None]
    else:
        y_ref[0] = _apply_act(acc, act, slope).astype(y_ref.dtype)


def _norm_act_kernel(y_ref, sum_ref, sq_ref, gamma_ref, beta_ref, out_ref, *,
                     count, act, slope):
    """Pass 2 (norm=True only): normalize + affine + activation for one tile."""
    y = y_ref[0]                                           # (tp, Cpad) f32
    inv_n = 1.0 / count
    mean = sum_ref[0] * inv_n                              # (1, Cpad)
    ex2 = sq_ref[0] * inv_n
    var = jnp.maximum(ex2 - mean * mean, 0.0)              # biased variance
    inv_std = jax.lax.rsqrt(var + _EPS)
    yn = (y - mean) * (inv_std * gamma_ref[...]) + beta_ref[...]
    out_ref[0] = _apply_act(yn, act, slope).astype(out_ref.dtype)


def _round_up(v, m):
    return (v + m - 1) // m * m


def _pick_row_tile(h_out, w_out, target_rows=2048):
    """Largest divisor of h_out with (th*w_out) % 8 == 0 and tile <= target."""
    cands = [th for th in range(1, h_out + 1)
             if h_out % th == 0 and (th * w_out) % 8 == 0
             and th * w_out <= target_rows]
    return max(cands) if cands else h_out


def downsample_block(x_nchw, conv_weight, gamma=None, beta=None, *,
                     kernel_size, padding=None, norm=False, act=None,
                     leaky_slope=0.01, compute_dtype=jnp.bfloat16,
                     row_tile=None):
    """x_nchw: (N, Cin, H, W).  conv_weight: (Cout, Cin, k, k) (PyTorch layout)."""
    if act not in (None, "relu", "leaky_relu"):
        raise ValueError(f"unsupported act: {act}")
    if padding is None:
        padding = (kernel_size - 1) // 2
    if norm and (gamma is None or beta is None):
        raise ValueError("norm=True requires gamma and beta")

    k = kernel_size
    n, c_in, h, w = x_nchw.shape
    c_out = conv_weight.shape[0]
    h_out = (h + 2 * padding - k) // 2 + 1
    w_out = (w + 2 * padding - k) // 2 + 1
    p = h_out * w_out
    kq = (k + 1) // 2
    hq = h_out + kq - 1
    wq = w_out + kq - 1
    cin4 = 4 * c_in
    cpad = _round_up(c_out, 128)            # lane-dense output channels

    # ---- space-to-depth pack of the padded input (no k^2 amplification);
    #      NCHW->NHWC is folded into this single rearrange.
    pad_b = 2 * hq - padding - h
    pad_r = 2 * wq - padding - w
    assert pad_b >= 0 and pad_r >= 0
    x_nhwc = jnp.transpose(x_nchw, (0, 2, 3, 1))
    xp = jnp.pad(x_nhwc, ((0, 0), (padding, pad_b), (padding, pad_r), (0, 0)))
    x_pack = xp.reshape(n, hq, 2, wq, 2, c_in)
    x_pack = x_pack.transpose(0, 1, 3, 2, 4, 5).reshape(n, hq, wq, cin4)
    x_pack = x_pack.astype(compute_dtype)

    # ---- repack conv weight (static): (Cout,Cin,k,k) -> (kq,kq,4Cin,Cpad)
    w_hwio = jnp.transpose(conv_weight, (2, 3, 1, 0))      # (k, k, Cin, Cout)
    w_p = jnp.pad(w_hwio, ((0, 2 * kq - k), (0, 2 * kq - k),
                           (0, 0), (0, cpad - c_out)))
    w_p = w_p.reshape(kq, 2, kq, 2, c_in, cpad)
    w_pack = w_p.transpose(0, 2, 1, 3, 4, 5).reshape(kq, kq, cin4, cpad)
    w_pack = w_pack.astype(compute_dtype)

    # ---- tiling of the output rows
    th = row_tile if row_tile is not None else _pick_row_tile(h_out, w_out)
    assert h_out % th == 0, (h_out, th)
    num_t = h_out // th
    tp = th * w_out

    esize = jnp.dtype(compute_dtype).itemsize
    blk_bytes = (hq * wq * cin4 * esize + kq * kq * cin4 * cpad * esize
                 + tp * cpad * 4 + 2 * cpad * 4)
    vmem_limit = int(min(max(2 * blk_bytes + (2 << 20), 32 << 20), 48 << 20))

    conv_cost = pl.CostEstimate(
        flops=2 * n * p * (kq * kq * cin4) * cpad,
        transcendentals=0,
        bytes_accessed=int(x_pack.size * esize + w_pack.size * esize
                           + n * p * cpad * 4 + 2 * n * cpad * 4))

    kern1 = functools.partial(_conv_kernel, th=th, w_out=w_out, kq=kq,
                              cin4=cin4, norm=norm, act=act, slope=leaky_slope)

    out_shapes = [jax.ShapeDtypeStruct((n, p, cpad), jnp.float32)]
    out_specs = [pl.BlockSpec((1, tp, cpad), lambda ni, ti: (ni, ti, 0))]
    if norm:
        out_shapes += [jax.ShapeDtypeStruct((n, 1, cpad), jnp.float32),
                       jax.ShapeDtypeStruct((n, 1, cpad), jnp.float32)]
        out_specs += [pl.BlockSpec((1, 1, cpad), lambda ni, ti: (ni, 0, 0)),
                      pl.BlockSpec((1, 1, cpad), lambda ni, ti: (ni, 0, 0))]

    res = pl.pallas_call(
        kern1,
        out_shape=out_shapes,
        grid_spec=pltpu.PrefetchScalarGridSpec(
            num_scalar_prefetch=0,
            grid=(n, num_t),
            in_specs=[
                pl.BlockSpec((1, hq, wq, cin4), lambda ni, ti: (ni, 0, 0, 0)),
                pl.BlockSpec((kq, kq, cin4, cpad), lambda ni, ti: (0, 0, 0, 0)),
            ],
            out_specs=out_specs,
        ),
        compiler_params=pltpu.CompilerParams(
            dimension_semantics=("parallel",
                                 "arbitrary" if norm else "parallel"),
            vmem_limit_bytes=vmem_limit),
        cost_estimate=conv_cost,
    )(x_pack, w_pack)

    if norm:
        y_raw, s_sum, s_sq = res
        gamma_p = jnp.pad(gamma.astype(jnp.float32).reshape(1, c_out),
                          ((0, 0), (0, cpad - c_out)))
        beta_p = jnp.pad(beta.astype(jnp.float32).reshape(1, c_out),
                         ((0, 0), (0, cpad - c_out)))
        kern2 = functools.partial(_norm_act_kernel, count=float(p), act=act,
                                  slope=leaky_slope)
        norm_cost = pl.CostEstimate(
            flops=8 * n * p * cpad,
            transcendentals=n * cpad,
            bytes_accessed=int(2 * n * p * cpad * 4 + 2 * n * cpad * 4))
        y_lin = pl.pallas_call(
            kern2,
            out_shape=jax.ShapeDtypeStruct((n, p, cpad), jnp.float32),
            grid_spec=pltpu.PrefetchScalarGridSpec(
                num_scalar_prefetch=0,
                grid=(n, num_t),
                in_specs=[
                    pl.BlockSpec((1, tp, cpad), lambda ni, ti: (ni, ti, 0)),
                    pl.BlockSpec((1, 1, cpad), lambda ni, ti: (ni, 0, 0)),
                    pl.BlockSpec((1, 1, cpad), lambda ni, ti: (ni, 0, 0)),
                    pl.BlockSpec((1, cpad), lambda ni, ti: (0, 0)),
                    pl.BlockSpec((1, cpad), lambda ni, ti: (0, 0)),
                ],
                out_specs=pl.BlockSpec((1, tp, cpad),
                                       lambda ni, ti: (ni, ti, 0)),
            ),
            compiler_params=pltpu.CompilerParams(
                dimension_semantics=("parallel", "parallel"),
                vmem_limit_bytes=vmem_limit),
            cost_estimate=norm_cost,
        )(y_raw, s_sum, s_sq, gamma_p, beta_p)
    else:
        y_lin = res[0]

    # (N, P, Cpad) -> (N, Hout, Wout, Cout) -> NCHW (single fused XLA copy).
    out_nhwc = y_lin.reshape(n, h_out, w_out, cpad)[..., :c_out]
    return jnp.transpose(out_nhwc, (0, 3, 1, 2))


def _reference(x_nchw, conv_weight, gamma, beta, *, padding, norm, act,
               leaky_slope=0.01):
    """Pure-JAX (lax.conv, full f32 precision) reference."""
    y = jax.lax.conv_general_dilated(
        x_nchw, conv_weight, window_strides=(2, 2),
        padding=((padding, padding), (padding, padding)),
        dimension_numbers=("NCHW", "OIHW", "NCHW"),
        precision=jax.lax.Precision.HIGHEST)
    if norm:
        mean = jnp.mean(y, axis=(2, 3), keepdims=True)
        var = jnp.mean((y - mean) ** 2, axis=(2, 3), keepdims=True)
        y = (y - mean) * jax.lax.rsqrt(var + _EPS)
        y = y * gamma.reshape(1, -1, 1, 1) + beta.reshape(1, -1, 1, 1)
    if act == "relu":
        y = jnp.maximum(y, 0.0)
    elif act == "leaky_relu":
        y = jnp.where(y >= 0, y, leaky_slope * y)
    return y


if __name__ == "__main__":
    key = jax.random.PRNGKey(0)
    kx, kw, kg, kb = jax.random.split(key, 4)

    # DownsampleBlock(input_features=4, output_features=8, kernel_size=3,
    #                 norm=True, act=nn.ReLU)
    N, C_IN, H, W = 2, 4, 16, 16
    C_OUT, KS = 8, 3
    PAD = (KS - 1) // 2

    x = jax.random.normal(kx, (N, C_IN, H, W), dtype=jnp.float32)
    conv_w = 0.05 * jax.random.normal(kw, (C_OUT, C_IN, KS, KS), dtype=jnp.float32)
    gamma = 1.0 + 0.1 * jax.random.normal(kg, (C_OUT,), dtype=jnp.float32)
    beta = 0.1 * jax.random.normal(kb, (C_OUT,), dtype=jnp.float32)

    # References: full f32, and with inputs rounded to bf16 (matches the
    # kernel's default bf16 matmul inputs; products/accumulation stay f32).
    x_bf = x.astype(jnp.bfloat16).astype(jnp.float32)
    w_bf = conv_w.astype(jnp.bfloat16).astype(jnp.float32)
    ref_f32 = _reference(x, conv_w, gamma, beta, padding=PAD, norm=True, act="relu")
    ref_bf16 = _reference(x_bf, w_bf, gamma, beta, padding=PAD, norm=True, act="relu")

    # 1) default fast path: bf16 matmul inputs, norm + ReLU (single row tile).
    out1 = jax.block_until_ready(
        downsample_block(x, conv_w, gamma, beta, kernel_size=KS,
                         norm=True, act="relu"))
    assert out1.shape == (N, C_OUT, H // 2, W // 2), out1.shape
    assert jnp.allclose(out1, ref_bf16, atol=1e-3, rtol=1e-3), \
        float(jnp.abs(out1 - ref_bf16).max())

    # 2) f32 matmul path (loose tol: covers reduced-precision f32 MXU lowering).
    out2 = jax.block_until_ready(
        downsample_block(x, conv_w, gamma, beta, kernel_size=KS,
                         norm=True, act="relu", compute_dtype=jnp.float32))
    assert jnp.allclose(out2, ref_f32, atol=1e-2, rtol=1e-2), \
        float(jnp.abs(out2 - ref_f32).max())

    # 3) no-norm + leaky_relu path (single fused kernel, no stats / 2nd pass).
    out3 = jax.block_until_ready(
        downsample_block(x, conv_w, kernel_size=KS, norm=False, act="leaky_relu"))
    ref3 = _reference(x_bf, w_bf, gamma, beta, padding=PAD, norm=False,
                      act="leaky_relu")
    assert jnp.allclose(out3, ref3, atol=1e-3, rtol=1e-3), \
        float(jnp.abs(out3 - ref3).max())

    # 4) forced multi-row-tile path: exercises streaming-stats accumulator
    #    across the 'arbitrary' grid axis + tiled normalization pass.
    out4 = jax.block_until_ready(
        downsample_block(x, conv_w, gamma, beta, kernel_size=KS,
                         norm=True, act="relu", row_tile=2))
    assert jnp.allclose(out4, ref_bf16, atol=1e-3, rtol=1e-3), \
        float(jnp.abs(out4 - ref_bf16).max())

    print("KERNEL_OK")
</pallas_src>

<mosaic_0001>
module attributes {stable_mosaic.version = 11 : i64} {
  func.func @_conv_kernel(%arg0: i32, %arg1: i32, %arg2: memref<1x9x9x16xbf16, #tpu.memory_space<vmem>>, %arg3: memref<2x2x16x128xbf16, #tpu.memory_space<vmem>>, %arg4: memref<1x64x128xf32, #tpu.memory_space<vmem>>, %arg5: memref<1x1x128xf32, #tpu.memory_space<vmem>>, %arg6: memref<1x1x128xf32, #tpu.memory_space<vmem>>) attributes {dimension_semantics = [#tpu.dimension_semantics<parallel>, #tpu.dimension_semantics<arbitrary>], iteration_bounds = array<i64: 2, 1>, scalar_prefetch = 0 : i64, scratch_operands = 0 : i64, tpu.core_type = #tpu.core_type<tc>, window_params = [{transform_indices = @transform_0, window_bounds = array<i64: 1, 9, 9, 16>}, {pipeline_mode = #tpu.pipeline_mode<synchronous>, transform_indices = @transform_1, window_bounds = array<i64: 2, 2, 16, 128>}, {transform_indices = @transform_2, window_bounds = array<i64: 1, 64, 128>}, {transform_indices = @transform_3, window_bounds = array<i64: 1, 1, 128>}, {transform_indices = @transform_4, window_bounds = array<i64: 1, 1, 128>}]} {
    %c8_i32 = arith.constant 8 : i32
    %0 = arith.muli %arg1, %c8_i32 : i32
    %1 = tpu.assume_multiple %0, 8 : i32
    %c0 = arith.constant 0 : index
    %2 = arith.index_cast %1 : i32 to index
    %c0_0 = arith.constant 0 : index
    %c0_1 = arith.constant 0 : index
    %3 = vector.load %arg2[%c0, %2, %c0_0, %c0_1] : memref<1x9x9x16xbf16, #tpu.memory_space<vmem>>, vector<1x9x9x16xbf16>
    %4 = vector.shape_cast %3 : vector<1x9x9x16xbf16> to vector<9x9x16xbf16>
    %cst = arith.constant 0.000000e+00 : f32
    %5 = vector.broadcast %cst : f32 to vector<64x128xf32>
    %6 = vector.extract_strided_slice %4 {offsets = [0, 0, 0], sizes = [8, 8, 16], strides = [1, 1, 1]} : vector<9x9x16xbf16> to vector<8x8x16xbf16>
    %7 = vector.shape_cast %6 : vector<8x8x16xbf16> to vector<64x16xbf16>
    %c0_2 = arith.constant 0 : index
    %c0_3 = arith.constant 0 : index
    %c0_4 = arith.constant 0 : index
    %c0_5 = arith.constant 0 : index
    %8 = vector.load %arg3[%c0_2, %c0_3, %c0_4, %c0_5] : memref<2x2x16x128xbf16, #tpu.memory_space<vmem>>, vector<1x1x16x128xbf16>
    %9 = vector.shape_cast %8 : vector<1x1x16x128xbf16> to vector<16x128xbf16>
    %cst_6 = arith.constant dense<0.000000e+00> : vector<64x128xf32>
    %10 = tpu.matmul %7, %9, %cst_6 {dimension_numbers = #tpu.dot_dimension_numbers<[1], [0], [0], [1], [0, 0, 1, 1], [], []>} : vector<64x16xbf16>, vector<16x128xbf16>, vector<64x128xf32> -> vector<64x128xf32>
    %11 = arith.addf %5, %10 : vector<64x128xf32>
    %12 = vector.extract_strided_slice %4 {offsets = [0, 1, 0], sizes = [8, 8, 16], strides = [1, 1, 1]} : vector<9x9x16xbf16> to vector<8x8x16xbf16>
    %13 = vector.shape_cast %12 : vector<8x8x16xbf16> to vector<64x16xbf16>
    %c0_7 = arith.constant 0 : index
    %c1 = arith.constant 1 : index
    %c0_8 = arith.constant 0 : index
    %c0_9 = arith.constant 0 : index
    %14 = vector.load %arg3[%c0_7, %c1, %c0_8, %c0_9] : memref<2x2x16x128xbf16, #tpu.memory_space<vmem>>, vector<1x1x16x128xbf16>
    %15 = vector.shape_cast %14 : vector<1x1x16x128xbf16> to vector<16x128xbf16>
    %cst_10 = arith.constant dense<0.000000e+00> : vector<64x128xf32>
    %16 = tpu.matmul %13, %15, %cst_10 {dimension_numbers = #tpu.dot_dimension_numbers<[1], [0], [0], [1], [0, 0, 1, 1], [], []>} : vector<64x16xbf16>, vector<16x128xbf16>, vector<64x128xf32> -> vector<64x128xf32>
    %17 = arith.addf %11, %16 : vector<64x128xf32>
    %18 = vector.extract_strided_slice %4 {offsets = [1, 0, 0], sizes = [8, 8, 16], strides = [1, 1, 1]} : vector<9x9x16xbf16> to vector<8x8x16xbf16>
    %19 = vector.shape_cast %18 : vector<8x8x16xbf16> to vector<64x16xbf16>
    %c1_11 = arith.constant 1 : index
    %c0_12 = arith.constant 0 : index
    %c0_13 = arith.constant 0 : index
    %c0_14 = arith.constant 0 : index
    %20 = vector.load %arg3[%c1_11, %c0_12, %c0_13, %c0_14] : memref<2x2x16x128xbf16, #tpu.memory_space<vmem>>, vector<1x1x16x128xbf16>
    %21 = vector.shape_cast %20 : vector<1x1x16x128xbf16> to vector<16x128xbf16>
    %cst_15 = arith.constant dense<0.000000e+00> : vector<64x128xf32>
    %22 = tpu.matmul %19, %21, %cst_15 {dimension_numbers = #tpu.dot_dimension_numbers<[1], [0], [0], [1], [0, 0, 1, 1], [], []>} : vector<64x16xbf16>, vector<16x128xbf16>, vector<64x128xf32> -> vector<64x128xf32>
    %23 = arith.addf %17, %22 : vector<64x128xf32>
    %24 = vector.extract_strided_slice %4 {offsets = [1, 1, 0], sizes = [8, 8, 16], strides = [1, 1, 1]} : vector<9x9x16xbf16> to vector<8x8x16xbf16>
    %25 = vector.shape_cast %24 : vector<8x8x16xbf16> to vector<64x16xbf16>
    %c1_16 = arith.constant 1 : index
    %c1_17 = arith.constant 1 : index
    %c0_18 = arith.constant 0 : index
    %c0_19 = arith.constant 0 : index
    %26 = vector.load %arg3[%c1_16, %c1_17, %c0_18, %c0_19] : memref<2x2x16x128xbf16, #tpu.memory_space<vmem>>, vector<1x1x16x128xbf16>
    %27 = vector.shape_cast %26 : vector<1x1x16x128xbf16> to vector<16x128xbf16>
    %cst_20 = arith.constant dense<0.000000e+00> : vector<64x128xf32>
    %28 = tpu.matmul %25, %27, %cst_20 {dimension_numbers = #tpu.dot_dimension_numbers<[1], [0], [0], [1], [0, 0, 1, 1], [], []>} : vector<64x16xbf16>, vector<16x128xbf16>, vector<64x128xf32> -> vector<64x128xf32>
    %29 = arith.addf %23, %28 : vector<64x128xf32>
    %c0_21 = arith.constant 0 : index
    %c0_22 = arith.constant 0 : index
    %c0_23 = arith.constant 0 : index
    %30 = vector.load %arg4[%c0_21, %c0_22, %c0_23] : memref<1x64x128xf32, #tpu.memory_space<vmem>>, vector<1x64x128xf32>
    %31 = vector.shape_cast %30 : vector<1x64x128xf32> to vector<64x128xf32>
    %32 = vector.shape_cast %29 : vector<64x128xf32> to vector<1x64x128xf32>
    tpu.vector_store %arg4[%c0_21, %c0_22, %c0_23], %32 {strides = array<i32>} : memref<1x64x128xf32, #tpu.memory_space<vmem>>, vector<1x64x128xf32>,
    %c0_i32 = arith.constant 0 : i32
    %33 = arith.cmpi eq, %arg1, %c0_i32 : i32
    %34 = arith.extui %33 : i1 to i32
    %c0_i32_24 = arith.constant 0 : i32
    %35 = arith.cmpi ne, %34, %c0_i32_24 : i32
    scf.if %35 {
      %cst_39 = arith.constant 0.000000e+00 : f32
      %49 = vector.broadcast %cst_39 : f32 to vector<1x1x128xf32>
      %c0_40 = arith.constant 0 : index
      %c0_41 = arith.constant 0 : index
      %c0_42 = arith.constant 0 : index
      %50 = vector.load %arg5[%c0_40, %c0_41, %c0_42] : memref<1x1x128xf32, #tpu.memory_space<vmem>>, vector<1x1x128xf32>
      tpu.vector_store %arg5[%c0_40, %c0_41, %c0_42], %49 {strides = array<i32>} : memref<1x1x128xf32, #tpu.memory_space<vmem>>, vector<1x1x128xf32>,
      %cst_43 = arith.constant 0.000000e+00 : f32
      %51 = vector.broadcast %cst_43 : f32 to vector<1x1x128xf32>
      %c0_44 = arith.constant 0 : index
      %c0_45 = arith.constant 0 : index
      %c0_46 = arith.constant 0 : index
      %52 = vector.load %arg6[%c0_44, %c0_45, %c0_46] : memref<1x1x128xf32, #tpu.memory_space<vmem>>, vector<1x1x128xf32>
      tpu.vector_store %arg6[%c0_44, %c0_45, %c0_46], %51 {strides = array<i32>} : memref<1x1x128xf32, #tpu.memory_space<vmem>>, vector<1x1x128xf32>,
    } else {
    }
    %c0_25 = arith.constant 0 : index
    %c0_26 = arith.constant 0 : index
    %c0_27 = arith.constant 0 : index
    %36 = vector.load %arg5[%c0_25, %c0_26, %c0_27] : memref<1x1x128xf32, #tpu.memory_space<vmem>>, vector<1x1x128xf32>
    %cst_28 = arith.constant dense<0.000000e+00> : vector<128xf32>
    %37 = vector.multi_reduction <add>, %29, %cst_28 [0] : vector<64x128xf32> to vector<128xf32>
    %38 = vector.shape_cast %37 : vector<128xf32> to vector<1x128xf32>
    %39 = vector.shape_cast %38 : vector<1x128xf32> to vector<1x1x128xf32>
    %40 = arith.addf %36, %39 : vector<1x1x128xf32>
    %c0_29 = arith.constant 0 : index
    %c0_30 = arith.constant 0 : index
    %c0_31 = arith.constant 0 : index
    %41 = vector.load %arg5[%c0_29, %c0_30, %c0_31] : memref<1x1x128xf32, #tpu.memory_space<vmem>>, vector<1x1x128xf32>
    tpu.vector_store %arg5[%c0_29, %c0_30, %c0_31], %40 {strides = array<i32>} : memref<1x1x128xf32, #tpu.memory_space<vmem>>, vector<1x1x128xf32>,
    %c0_32 = arith.constant 0 : index
    %c0_33 = arith.constant 0 : index
    %c0_34 = arith.constant 0 : index
    %42 = vector.load %arg6[%c0_32, %c0_33, %c0_34] : memref<1x1x128xf32, #tpu.memory_space<vmem>>, vector<1x1x128xf32>
    %43 = arith.mulf %29, %29 : vector<64x128xf32>
    %cst_35 = arith.constant dense<0.000000e+00> : vector<128xf32>
    %44 = vector.multi_reduction <add>, %43, %cst_35 [0] : vector<64x128xf32> to vector<128xf32>
    %45 = vector.shape_cast %44 : vector<128xf32> to vector<1x128xf32>
    %46 = vector.shape_cast %45 : vector<1x128xf32> to vector<1x1x128xf32>
    %47 = arith.addf %42, %46 : vector<1x1x128xf32>
    %c0_36 = arith.constant 0 : index
    %c0_37 = arith.constant 0 : index
    %c0_38 = arith.constant 0 : index
    %48 = vector.load %arg6[%c0_36, %c0_37, %c0_38] : memref<1x1x128xf32, #tpu.memory_space<vmem>>, vector<1x1x128xf32>
    tpu.vector_store %arg6[%c0_36, %c0_37, %c0_38], %47 {strides = array<i32>} : memref<1x1x128xf32, #tpu.memory_space<vmem>>, vector<1x1x128xf32>,
    return
  }
  func.func @transform_0(%arg0: i32, %arg1: i32) -> (i32, i32, i32, i32) {
    %c0_i32 = arith.constant 0 : i32
    %c0_i32_0 = arith.constant 0 : i32
    %c0_i32_1 = arith.constant 0 : i32
    %c0_i32_2 = arith.constant 0 : i32
    return %arg0, %c0_i32, %c0_i32_0, %c0_i32_1 : i32, i32, i32, i32
  }
  func.func @transform_1(%arg0: i32, %arg1: i32) -> (i32, i32, i32, i32) {
    %c0_i32 = arith.constant 0 : i32
    %c0_i32_0 = arith.constant 0 : i32
    %c0_i32_1 = arith.constant 0 : i32
    %c0_i32_2 = arith.constant 0 : i32
    %c0_i32_3 = arith.constant 0 : i32
    return %c0_i32, %c0_i32_0, %c0_i32_1, %c0_i32_2 : i32, i32, i32, i32
  }
  func.func @transform_2(%arg0: i32, %arg1: i32) -> (i32, i32, i32) {
    %c0_i32 = arith.constant 0 : i32
    %c0_i32_0 = arith.constant 0 : i32
    return %arg0, %arg1, %c0_i32 : i32, i32, i32
  }
  func.func @transform_3(%arg0: i32, %arg1: i32) -> (i32, i32, i32) {
    %c0_i32 = arith.constant 0 : i32
    %c0_i32_0 = arith.constant 0 : i32
    %c0_i32_1 = arith.constant 0 : i32
    return %arg0, %c0_i32, %c0_i32_0 : i32, i32, i32
  }
  func.func @transform_4(%arg0: i32, %arg1: i32) -> (i32, i32, i32) {
    %c0_i32 = arith.constant 0 : i32
    %c0_i32_0 = arith.constant 0 : i32
    %c0_i32_1 = arith.constant 0 : i32
    return %arg0, %c0_i32, %c0_i32_0 : i32, i32, i32
  }
}

</mosaic_0001>

<llo_original>
// kernel: tpu_custom_call.1
$region0: #{tpu_custom_call.1}
  #allocation0 [shape = 'u32[]', space=smem, size = 0x4, offset = 0x4, fixed_abs, tag = 'smem constant byte address 0x4 - core index']
  #allocation1 [shape = 'u32[144,128]{1,0:T(1,128)}', space=vmem, size = 0x12000, scoped, tag = 'internal scratch']
  %s0 = inlined_call_operand.vmem [shape: bf16[2,9,9,16], index: 0, kind: input, shape index: {}]
  %s1 = inlined_call_operand.vmem [shape: bf16[2,2,16,128], index: 1, kind: input, shape index: {}]
  %s2 = inlined_call_operand.hbm [shape: f32[2,64,128], index: 2, kind: output, shape index: {0}]
  %s3 = inlined_call_operand.hbm [shape: f32[2,1,128], index: 3, kind: output, shape index: {1}]
  %s4 = inlined_call_operand.hbm [shape: f32[2,1,128], index: 4, kind: output, shape index: {2}]
  %5 = xla_tuple %s2, %s3, %s4
  %s6 = sld [smem:[#allocation0]]
  $region61: #{tpu_custom_call.1} parent=0
    _
  %s8 = ssub.s32 1, %s6
  %s9 = scalar_select 0, %s8, %s6
  $region1: #{tpu_custom_call.1} parent=0
    #allocation2 [shape = 'u8[65536]{0}', space=vmem, size = 0x10000, scoped, tag = 'output window, operand 0']
    #allocation3 [shape = 's32[2]{0}', space=sflag, size = 0x8, scoped, tag = 'scoped memory for tpu_custom_call.1']
    #allocation4 [shape = 'u8[1024]{0}', space=vmem, size = 0x400, scoped, tag = 'output window, operand 1']
    #allocation5 [shape = 's32[2]{0}', space=sflag, size = 0x8, scoped, tag = 'scoped memory for tpu_custom_call.1']
    #allocation6 [shape = 'u8[1024]{0}', space=vmem, size = 0x400, scoped, tag = 'output window, operand 2']
    %10 = vsyncpa [#allocation3], 0
    %s11 = scalar_lea.sflag [#allocation3], 1
    %12 = vsyncpa %s11, 0
    %13 = vsyncpa [#allocation5], 0
    %s14 = scalar_lea.sflag [#allocation5], 1
    %15 = vsyncpa %s14, 0
    loop: start=0, step=1, limit=4
    $region2: #{tpu_custom_call.1} parent=1 // loop_pre_header
      _
    $region3: #{tpu_custom_call.1} parent=1 // loop_header
      %s17 = sphi 0, %s21
      %p18 = scmp.ge.s32.totalorder %s17, 4
      %s24 = sphi 0, %s36
      %s25 = sphi 0, %s32
      %s26 = sphi 0, %s24
      %s27 = sphi 0, %s25
      %s28 = sphi 0, %s26
      %s29 = sphi 0, %s27
      %s39 = sphi 0, %s41
      %s42 = sphi 0, %s39
      %s43 = sphi 0, %s42
      %s59 = sphi 0, %s43
      %s63 = sphi 0, %s63
      %s65 = sphi 0, %s63
      %s66 = sphi 0, %s65
      %s80 = sphi 0, %s66
      %s88 = sphi 0, %s90
      %s91 = sphi 0, %s88
      %s92 = sphi 0, %s91
      %s108 = sphi 0, %s92
      %s114 = sphi 0, %s116
      %s117 = sphi 0, %s114
      %s118 = sphi 0, %s117
      %s134 = sphi 0, %s118
      %s140 = sphi 0, %s142
      %s143 = sphi 0, %s140
      %s144 = sphi 0, %s143
      %s160 = sphi 0, %s144
    $region4: #{tpu_custom_call.1} parent=1 // loop_header_branch
      %20 = sbr.rel (%p18) target = $region8
    $region5: #{tpu_custom_call.1} parent=1 // loop_body
      %s22 = ssub.s32 %s17, 1
      %s23 = ssub.s32 %s17, 2
      %s30 = sadd.s32 1, %s25
      %p31 = scmp.ge.s32.totalorder %s30, 1
      %s32 = scalar_select %p31, 0, %s30
      %s33 = sadd.s32 1, %s24
      %s34 = scalar_select %p31, %s33, %s24
      %p35 = scmp.ge.s32.totalorder %s34, 2
      %s36 = scalar_select %p35, 0, %s34
      %s37 = ssub.s32 %s24, %s36
      %p38 = scmp.eq.s32.totalorder %s37, 0
      %s40 = sadd.s32 %s39, 1
      %s41 = scalar_select %p38, %s39, %s40
      %p44 = pneg %p38
      %p45 = scmp.eq.s32.totalorder %s17, 1
      %p46 = por %p44, %p45
      %p47 = scmp.ne.s32.totalorder %s39, %s42
      %p48 = scmp.eq.s32.totalorder %s17, 0
      %p49 = por %p47, %p48
      %p50 = scmp.ne.s32.totalorder %s39, %s42
      %p51 = scmp.eq.s32.totalorder %s22, 1
      %p52 = por %p50, %p51
      %p53 = scmp.ne.s32.totalorder %s42, %s43
      %p54 = scmp.eq.s32.totalorder %s22, 0
      %p55 = por %p53, %p54
      %p56 = scmp.ne.s32.totalorder %s42, %s43
      %p57 = scmp.eq.s32.totalorder %s23, 1
      %p58 = por %p56, %p57
      %p60 = scmp.ne.s32.totalorder %s43, %s59
      %p61 = scmp.eq.s32.totalorder %s23, 0
      %p62 = por %p60, %p61
      %s64 = sadd.s32 %s63, 1
      %p67 = scmp.eq.s32.totalorder %s17, 1
      %p68 = scmp.ne.s32.totalorder %s63, %s65
      %p69 = scmp.eq.s32.totalorder %s17, 0
      %p70 = por %p68, %p69
      %p71 = scmp.ne.s32.totalorder %s63, %s65
      %p72 = scmp.eq.s32.totalorder %s22, 1
      %p73 = por %p71, %p72
      %p74 = scmp.ne.s32.totalorder %s65, %s66
      %p75 = scmp.eq.s32.totalorder %s22, 0
      %p76 = por %p74, %p75
      %p77 = scmp.ne.s32.totalorder %s65, %s66
      %p78 = scmp.eq.s32.totalorder %s23, 1
      %p79 = por %p77, %p78
      %p81 = scmp.ne.s32.totalorder %s66, %s80
      %p82 = scmp.eq.s32.totalorder %s23, 0
      %p83 = por %p81, %p82
      %s84 = ssub.s32 %s24, %s36
      %s85 = ssub.s32 %s25, %s32
      %s86 = sor.u32 %s84, %s85
      %p87 = scmp.eq.s32.totalorder %s86, 0
      %s89 = sadd.s32 %s88, 1
      %s90 = scalar_select %p87, %s88, %s89
      %p93 = pneg %p87
      %p94 = scmp.eq.s32.totalorder %s17, 1
      %p95 = por %p93, %p94
      %p96 = scmp.ne.s32.totalorder %s88, %s91
      %p97 = scmp.eq.s32.totalorder %s17, 0
      %p98 = por %p96, %p97
      %p99 = scmp.ne.s32.totalorder %s88, %s91
      %p100 = scmp.eq.s32.totalorder %s22, 1
      %p101 = por %p99, %p100
      %p102 = scmp.ne.s32.totalorder %s91, %s92
      %p103 = scmp.eq.s32.totalorder %s22, 0
      %p104 = por %p102, %p103
      %p105 = scmp.ne.s32.totalorder %s91, %s92
      %p106 = scmp.eq.s32.totalorder %s23, 1
      %p107 = por %p105, %p106
      %p109 = scmp.ne.s32.totalorder %s92, %s108
      %p110 = scmp.eq.s32.totalorder %s23, 0
      %p111 = por %p109, %p110
      %s112 = ssub.s32 %s24, %s36
      %p113 = scmp.eq.s32.totalorder %s112, 0
      %s115 = sadd.s32 %s114, 1
      %s116 = scalar_select %p113, %s114, %s115
      %p119 = pneg %p113
      %p120 = scmp.eq.s32.totalorder %s17, 1
      %p121 = por %p119, %p120
      %p122 = scmp.ne.s32.totalorder %s114, %s117
      %p123 = scmp.eq.s32.totalorder %s17, 0
      %p124 = por %p122, %p123
      %p125 = scmp.ne.s32.totalorder %s114, %s117
      %p126 = scmp.eq.s32.totalorder %s22, 1
      %p127 = por %p125, %p126
      %p128 = scmp.ne.s32.totalorder %s117, %s118
      %p129 = scmp.eq.s32.totalorder %s22, 0
      %p130 = por %p128, %p129
      %p131 = scmp.ne.s32.totalorder %s117, %s118
      %p132 = scmp.eq.s32.totalorder %s23, 1
      %p133 = por %p131, %p132
      %p135 = scmp.ne.s32.totalorder %s118, %s134
      %p136 = scmp.eq.s32.totalorder %s23, 0
      %p137 = por %p135, %p136
      %s138 = ssub.s32 %s24, %s36
      %p139 = scmp.eq.s32.totalorder %s138, 0
      %s141 = sadd.s32 %s140, 1
      %s142 = scalar_select %p139, %s140, %s141
      %p145 = pneg %p139
      %p146 = scmp.eq.s32.totalorder %s17, 1
      %p147 = por %p145, %p146
      %p148 = scmp.ne.s32.totalorder %s140, %s143
      %p149 = scmp.eq.s32.totalorder %s17, 0
      %p150 = por %p148, %p149
      %p151 = scmp.ne.s32.totalorder %s140, %s143
      %p152 = scmp.eq.s32.totalorder %s22, 1
      %p153 = por %p151, %p152
      %p154 = scmp.ne.s32.totalorder %s143, %s144
      %p155 = scmp.eq.s32.totalorder %s22, 0
      %p156 = por %p154, %p155
      %p157 = scmp.ne.s32.totalorder %s143, %s144
      %p158 = scmp.eq.s32.totalorder %s23, 1
      %p159 = por %p157, %p158
      %p161 = scmp.ne.s32.totalorder %s144, %s160
      %p162 = scmp.eq.s32.totalorder %s23, 0
      %p163 = por %p161, %p162
      %p164 = scmp.le.s32.totalorder 1, %s17
      %p165 = scmp.lt.s32.totalorder %s17, 3
      %p166 = pnand %p164, %p165
      %p167 = pneg %p166
      // Predicated region
      $region9: #{tpu_custom_call.1} parent=5 // pred_check
        _
      $region10: #{tpu_custom_call.1} parent=5 // pred_check_branch
        %169 = sbr.rel (%p166) target = $region12
      $region11: #{tpu_custom_call.1} parent=5 // pred_region
        %s170 = ssub.s32 %s17, 1
        // Predicated region
        $region13: #{tpu_custom_call.1} parent=11 // pred_check
          %p171 = pneg %p76
        $region14: #{tpu_custom_call.1} parent=11 // pred_check_branch
          %173 = sbr.rel (%p171) target = $region16
        $region15: #{tpu_custom_call.1} parent=11 // pred_region
          _
        $region16: #{tpu_custom_call.1} parent=11 // pred_fallthru
          _
      $region12: #{tpu_custom_call.1} parent=5 // pred_fallthru
        _
      %p174 = scmp.lt.s32.totalorder %s17, 2
      // Predicated region
      $region17: #{tpu_custom_call.1} parent=5 // pred_check
        %p175 = pneg %p174
      $region18: #{tpu_custom_call.1} parent=5 // pred_check_branch
        %177 = sbr.rel (%p175) target = $region20
      $region19: #{tpu_custom_call.1} parent=5 // pred_region
        // Predicated region
        $region21: #{tpu_custom_call.1} parent=19 // pred_check
          %p178 = pneg %p49
        $region22: #{tpu_custom_call.1} parent=19 // pred_check_branch
          %180 = sbr.rel (%p178) target = $region24
        $region23: #{tpu_custom_call.1} parent=19 // pred_region
          %p181 = scmp.lt.s32.totalorder %s24, 1
          %s182 = scalar_select %p181, %s24, 1
          %s183 = smul.addr %s182, 18
          %s184 = smul.addr %s183, 4
          %s185 = scalar_lea.vmem %s0, %s184
        $region24: #{tpu_custom_call.1} parent=19 // pred_fallthru
          _
      $region20: #{tpu_custom_call.1} parent=5 // pred_fallthru
        _
      %p186 = scmp.le.s32.totalorder 1, %s17
      %p187 = scmp.lt.s32.totalorder %s17, 3
      %p188 = pnand %p186, %p187
      %p189 = pneg %p188
      // Predicated region
      $region25: #{tpu_custom_call.1} parent=5 // pred_check
        _
      $region26: #{tpu_custom_call.1} parent=5 // pred_check_branch
        %191 = sbr.rel (%p188) target = $region28
      $region27: #{tpu_custom_call.1} parent=5 // pred_region
        %s192 = ssub.s32 %s17, 1
        %p193 = scmp.lt.s32.totalorder %s26, 1
        %s194 = scalar_select %p193, %s26, 1
        %s195 = smul.addr %s194, 18
        %s196 = smul.addr %s195, 4
        %s197 = scalar_lea.vmem %s0, %s196
        %p198 = pneg %p55
        %p199 = pneg %p52
        %p200 = pneg %p76
        %p201 = pneg %p73
        %p202 = pneg %p104
        %p203 = pneg %p101
        %s204 = sand.u32 %s91, 1
        %s205 = scalar_lea.sflag [#allocation3], %s204
        %s206 = sand.u32 %s91, 1
        %s207 = smul.addr %s206, 64
        %s208 = scalar_lea.vmem [#allocation2], %s207
        %p209 = pneg %p130
        %p210 = pneg %p127
        %s211 = sand.u32 %s22, 1
        %s212 = scalar_lea.sflag [#allocation5], %s211
        %s213 = sand.u32 %s117, 1
        %s214 = scalar_lea.vmem [#allocation4], %s213
        %p215 = pneg %p156
        %p216 = pneg %p153
        %s217 = sand.u32 %s22, 1
        %s218 = scalar_lea.sflag [#allocation5], %s217
        %s219 = sand.u32 %s143, 1
        %s220 = scalar_lea.vmem [#allocation6], %s219
        %p221 = scmp.lt.s32.totalorder %s26, 1
        %s222 = scalar_select %p221, %s26, 1
        %s223 = smul.addr %s222, 18
        %s224 = smul.addr %s223, 4
        %s225 = scalar_lea.vmem %s0, %s224
        %s226 = smul.u32 8, %s27
        %s228 = smul.u32 %s27, 8
        %s229 = smul.u32 %s228, 2
        %s230 = smul.addr %s229, 4
        %s231 = scalar_lea.vmem %s225, %s230
        %v232 = vld [vmem:[%s231] sm:$0xf]
        %v233 = vld [vmem:[%s231 + $0x4] sm:$0x1]
        %v234 = vld [vmem:[%s231 + $0x8] sm:$0xf]
        %v235 = vld [vmem:[%s231 + $0xc] sm:$0x1]
        %v236 = vld [vmem:[%s231 + $0x10] sm:$0xf]
        %v237 = vld [vmem:[%s231 + $0x14] sm:$0x1]
        %v238 = vld [vmem:[%s231 + $0x18] sm:$0xf]
        %v239 = vld [vmem:[%s231 + $0x1c] sm:$0x1]
        %v240 = vld [vmem:[%s231 + $0x20] sm:$0xf]
        %v241 = vld [vmem:[%s231 + $0x24] sm:$0x1]
        %v242 = vld [vmem:[%s231 + $0x28] sm:$0xf]
        %v243 = vld [vmem:[%s231 + $0x2c] sm:$0x1]
        %v244 = vld [vmem:[%s231 + $0x30] sm:$0xf]
        %v245 = vld [vmem:[%s231 + $0x34] sm:$0x1]
        %v246 = vld [vmem:[%s231 + $0x38] sm:$0xf]
        %v247 = vld [vmem:[%s231 + $0x3c] sm:$0x1]
        %v248 = vld [vmem:[%s231 + $0x40] sm:$0xf]
        %v249 = vld [vmem:[%s231 + $0x44] sm:$0x1]
        %v250 = vld [vmem:[%s1] sm:$0xf]
        %v251 = vld [vmem:[%s1 + $0x4] sm:$0xf]
        %vm252 = vsmask.f32 3328
        %vm253 = vsmask.f32 7440
        %vm254 = vmor %vm252, %vm253
        %v256 = vshrl.u32 %v232, 16
        %v258 = vrot.slane %v256, 4
        %v259 = vshll.u32 %v232, 16
        %v261 = vrot.slane %v259, 5
        %v262 = vor.u32 %v258, %v261
        %v263 = vrot.slane %v262, 4
        %v265 = vshll.u32 %v233, 16
        %v267 = vrot.slane %v265, 5
        %v268 = vsel %vm254, %v263, %v267
        %v270 = vshrl.u32 %v234, 16
        %v272 = vrot.slane %v270, 4
        %v273 = vshll.u32 %v234, 16
        %v275 = vrot.slane %v273, 5
        %v276 = vor.u32 %v272, %v275
        %v277 = vrot.slane %v276, 4
        %v279 = vshll.u32 %v235, 16
        %v281 = vrot.slane %v279, 5
        %v282 = vsel %vm254, %v277, %v281
        %v284 = vshrl.u32 %v236, 16
        %v286 = vrot.slane %v284, 4
        %v287 = vshll.u32 %v236, 16
        %v289 = vrot.slane %v287, 5
        %v290 = vor.u32 %v286, %v289
        %v291 = vrot.slane %v290, 4
        %v293 = vshll.u32 %v237, 16
        %v295 = vrot.slane %v293, 5
        %v296 = vsel %vm254, %v291, %v295
        %v298 = vshrl.u32 %v238, 16
        %v300 = vrot.slane %v298, 4
        %v301 = vshll.u32 %v238, 16
        %v303 = vrot.slane %v301, 5
        %v304 = vor.u32 %v300, %v303
        %v305 = vrot.slane %v304, 4
        %v307 = vshll.u32 %v239, 16
        %v309 = vrot.slane %v307, 5
        %v310 = vsel %vm254, %v305, %v309
        %v312 = vshrl.u32 %v240, 16
        %v314 = vrot.slane %v312, 4
        %v315 = vshll.u32 %v240, 16
        %v317 = vrot.slane %v315, 5
        %v318 = vor.u32 %v314, %v317
        %v319 = vrot.slane %v318, 4
        %v321 = vshll.u32 %v241, 16
        %v323 = vrot.slane %v321, 5
        %v324 = vsel %vm254, %v319, %v323
        %v326 = vshrl.u32 %v242, 16
        %v328 = vrot.slane %v326, 4
        %v329 = vshll.u32 %v242, 16
        %v331 = vrot.slane %v329, 5
        %v332 = vor.u32 %v328, %v331
        %v333 = vrot.slane %v332, 4
        %v335 = vshll.u32 %v243, 16
        %v337 = vrot.slane %v335, 5
        %v338 = vsel %vm254, %v333, %v337
        %v340 = vshrl.u32 %v244, 16
        %v342 = vrot.slane %v340, 4
        %v343 = vshll.u32 %v244, 16
        %v345 = vrot.slane %v343, 5
        %v346 = vor.u32 %v342, %v345
        %v347 = vrot.slane %v346, 4
        %v349 = vshll.u32 %v245, 16
        %v351 = vrot.slane %v349, 5
        %v352 = vsel %vm254, %v347, %v351
        %v354 = vshrl.u32 %v246, 16
        %v356 = vrot.slane %v354, 4
        %v357 = vshll.u32 %v246, 16
        %v359 = vrot.slane %v357, 5
        %v360 = vor.u32 %v356, %v359
        %v361 = vrot.slane %v360, 4
        %v363 = vshll.u32 %v247, 16
        %v365 = vrot.slane %v363, 5
        %v366 = vsel %vm254, %v361, %v365
        %s367 = scalar_lea.vmem %s1, 8
        %v368 = vld [vmem:[%s367] sm:$0xf]
        %v369 = vld [vmem:[%s367 + $0x4] sm:$0xf]
        %v370 = vunpack.c.l.b16 %v268
        %v371 = vunpack.c.l.b16 %v282
        %v372 = vunpack.c.l.b16 %v296
        %v373 = vunpack.c.l.b16 %v310
        %v374 = vunpack.c.l.b16 %v324
        %v375 = vunpack.c.l.b16 %v338
        %v376 = vunpack.c.l.b16 %v352
        %v377 = vunpack.c.l.b16 %v366
        %v378 = vpack.c.b16 %v371, %v370
        %v379 = vpack.c.b16 %v373, %v372
        %v380 = vpack.c.b16 %v375, %v374
        %v381 = vpack.c.b16 %v377, %v376
        %v384 = vunpack.c.l.b16 %v368
        %v385 = vunpack.c.l.b16 %v369
        %v386 = vpack.c.b16 %v385, %v384
        %vm388 = vcmask 130048
        %v390 = vsel %vm388, %v378, 0
        %v393 = vsel %vm388, %v379, 0
        %v396 = vsel %vm388, %v380, 0
        %v399 = vsel %vm388, %v381, 0
        %401 = vmatprep.subr.bf16.mxu0 0
        %402 = vmatpush1.bf16.msra.mxu0 0
        %403 = vmatprep.subr.bf16.mxu0 0
        %404 = vmatpush1.bf16.msra.mxu0 0
        %405 = vmatprep.subr.bf16.mxu0 0
        %406 = vmatpush1.bf16.msra.mxu0 0
        %407 = vmatprep.subr.bf16.mxu0 0
        %408 = vmatpush1.bf16.msra.mxu0 0
        %409 = vmatprep.subr.bf16.mxu0 0
        %410 = vmatpush1.bf16.msra.mxu0 0
        %411 = vmatprep.subr.bf16.mxu0 0
        %412 = vmatpush1.bf16.msra.mxu0 0
        %413 = vmatprep.subr.bf16.mxu0 0
        %414 = vmatpush1.bf16.msra.mxu0 0
        %415 = vmatprep.subr.bf16.mxu0 0
        %416 = vmatpush1.bf16.msra.mxu0 %v386
        %417 = vmatprep.subr.bf16.mxu0 0
        %418 = vmatpush2.bf16.msra.mxu0 0
        %419 = vmatprep.subr.bf16.mxu0 0
        %420 = vmatpush2.bf16.msra.mxu0 0
        %421 = vmatprep.subr.bf16.mxu0 0
        %422 = vmatpush2.bf16.msra.mxu0 0
        %423 = vmatprep.subr.bf16.mxu0 0
        %424 = vmatpush2.bf16.msra.mxu0 0
        %425 = vmatprep.subr.bf16.mxu0 0
        %426 = vmatpush2.bf16.msra.mxu0 0
        %427 = vmatprep.subr.bf16.mxu0 0
        %428 = vmatpush2.bf16.msra.mxu0 0
        %429 = vmatprep.subr.bf16.mxu0 0
        %430 = vmatpush2.bf16.msra.mxu0 0
        %431 = vmatprep.subr.bf16.mxu0 0
        %432 = vmatpush2.bf16.msra.mxu0 0
        %433 = vmatprep.mubr.bf16.mxu0 0
        %434 = vmatmul.mubr.bf16.gmra.mxu0 %v390
        %v435 = vpop.f32.mrf.mxu0
        %v436 = vadd.f32 0.0, %v435
        %v437 = vpop.f32.mrf.mxu0
        %v438 = vpop.f32.mrf.mxu0
        %v439 = vadd.f32 0.0, %v438
        %v440 = vpop.f32.mrf.mxu0
        %441 = vmatprep.mubr.bf16.mxu0 0
        %442 = vmatmul.mubr.bf16.gmra.mxu0 %v393
        %v443 = vpop.f32.mrf.mxu0
        %v444 = vadd.f32 0.0, %v443
        %v445 = vpop.f32.mrf.mxu0
        %v446 = vpop.f32.mrf.mxu0
        %v447 = vadd.f32 0.0, %v446
        %v448 = vpop.f32.mrf.mxu0
        %449 = vmatprep.mubr.bf16.mxu0 0
        %450 = vmatmul.mubr.bf16.gmra.mxu0 %v396
        %v451 = vpop.f32.mrf.mxu0
        %v452 = vadd.f32 0.0, %v451
        %v453 = vpop.f32.mrf.mxu0
        %v454 = vpop.f32.mrf.mxu0
        %v455 = vadd.f32 0.0, %v454
        %v456 = vpop.f32.mrf.mxu0
        %457 = vmatprep.mubr.bf16.mxu0 0
        %458 = vmatmul.mubr.bf16.gmra.mxu0 %v399
        %v459 = vpop.f32.mrf.mxu0
        %v460 = vadd.f32 0.0, %v459
        %v461 = vpop.f32.mrf.mxu0
        %v462 = vpop.f32.mrf.mxu0
        %v463 = vadd.f32 0.0, %v462
        %v464 = vpop.f32.mrf.mxu0
        %465 = vdwg.mxu0
        %v474 = vunpack.c.l.b16 %v232
        %v475 = vunpack.c.l.b16 %v234
        %v476 = vunpack.c.l.b16 %v236
        %v477 = vunpack.c.l.b16 %v238
        %v478 = vunpack.c.l.b16 %v240
        %v479 = vunpack.c.l.b16 %v242
        %v480 = vunpack.c.l.b16 %v244
        %v481 = vunpack.c.l.b16 %v246
        %v482 = vpack.c.b16 %v475, %v474
        %v483 = vpack.c.b16 %v477, %v476
        %v484 = vpack.c.b16 %v479, %v478
        %v485 = vpack.c.b16 %v481, %v480
        %v488 = vunpack.c.l.b16 %v250
        %v489 = vunpack.c.l.b16 %v251
        %v490 = vpack.c.b16 %v489, %v488
        %v493 = vsel %vm388, %v482, 0
        %v496 = vsel %vm388, %v483, 0
        %v499 = vsel %vm388, %v484, 0
        %v502 = vsel %vm388, %v485, 0
        %504 = vmatprep.subr.bf16.mxu0 0
        %505 = vmatpush1.bf16.msra.mxu0 0
        %506 = vmatprep.subr.bf16.mxu0 0
        %507 = vmatpush1.bf16.msra.mxu0 0
        %508 = vmatprep.subr.bf16.mxu0 0
        %509 = vmatpush1.bf16.msra.mxu0 0
        %510 = vmatprep.subr.bf16.mxu0 0
        %511 = vmatpush1.bf16.msra.mxu0 0
        %512 = vmatprep.subr.bf16.mxu0 0
        %513 = vmatpush1.bf16.msra.mxu0 0
        %514 = vmatprep.subr.bf16.mxu0 0
        %515 = vmatpush1.bf16.msra.mxu0 0
        %516 = vmatprep.subr.bf16.mxu0 0
        %517 = vmatpush1.bf16.msra.mxu0 0
        %518 = vmatprep.subr.bf16.mxu0 0
        %519 = vmatpush1.bf16.msra.mxu0 %v490
        %520 = vmatprep.subr.bf16.mxu0 0
        %521 = vmatpush2.bf16.msra.mxu0 0
        %522 = vmatprep.subr.bf16.mxu0 0
        %523 = vmatpush2.bf16.msra.mxu0 0
        %524 = vmatprep.subr.bf16.mxu0 0
        %525 = vmatpush2.bf16.msra.mxu0 0
        %526 = vmatprep.subr.bf16.mxu0 0
        %527 = vmatpush2.bf16.msra.mxu0 0
        %528 = vmatprep.subr.bf16.mxu0 0
        %529 = vmatpush2.bf16.msra.mxu0 0
        %530 = vmatprep.subr.bf16.mxu0 0
        %531 = vmatpush2.bf16.msra.mxu0 0
        %532 = vmatprep.subr.bf16.mxu0 0
        %533 = vmatpush2.bf16.msra.mxu0 0
        %534 = vmatprep.subr.bf16.mxu0 0
        %535 = vmatpush2.bf16.msra.mxu0 0
        %536 = vmatprep.mubr.bf16.mxu0 0
        %537 = vmatmul.mubr.bf16.gmra.mxu0 %v493
        %v538 = vpop.f32.mrf.mxu0
        %v539 = vadd.f32 %v436, %v538
        %v540 = vpop.f32.mrf.mxu0
        %v541 = vpop.f32.mrf.mxu0
        %v542 = vadd.f32 %v439, %v541
        %v543 = vpop.f32.mrf.mxu0
        %544 = vmatprep.mubr.bf16.mxu0 0
        %545 = vmatmul.mubr.bf16.gmra.mxu0 %v496
        %v546 = vpop.f32.mrf.mxu0
        %v547 = vadd.f32 %v444, %v546
        %v548 = vpop.f32.mrf.mxu0
        %v549 = vpop.f32.mrf.mxu0
        %v550 = vadd.f32 %v447, %v549
        %v551 = vpop.f32.mrf.mxu0
        %552 = vmatprep.mubr.bf16.mxu0 0
        %553 = vmatmul.mubr.bf16.gmra.mxu0 %v499
        %v554 = vpop.f32.mrf.mxu0
        %v555 = vadd.f32 %v452, %v554
        %v556 = vpop.f32.mrf.mxu0
        %v557 = vpop.f32.mrf.mxu0
        %v558 = vadd.f32 %v455, %v557
        %v559 = vpop.f32.mrf.mxu0
        %560 = vmatprep.mubr.bf16.mxu0 0
        %561 = vmatmul.mubr.bf16.gmra.mxu0 %v502
        %v562 = vpop.f32.mrf.mxu0
        %v563 = vadd.f32 %v460, %v562
        %v564 = vpop.f32.mrf.mxu0
        %v565 = vpop.f32.mrf.mxu0
        %v566 = vadd.f32 %v463, %v565
        %v567 = vpop.f32.mrf.mxu0
        %568 = vdwg.mxu0
        %s569 = scalar_lea.vmem %s1, 16
        %v570 = vld [vmem:[%s569] sm:$0xf]
        %v571 = vld [vmem:[%s569 + $0x4] sm:$0xf]
        %v573 = vunpack.c.l.b16 %v248
        %v574 = vpack.c.b16 %v476, %v475
        %v575 = vpack.c.b16 %v478, %v477
        %v576 = vpack.c.b16 %v480, %v479
        %v577 = vpack.c.b16 %v573, %v481
        %v580 = vunpack.c.l.b16 %v570
        %v581 = vunpack.c.l.b16 %v571
        %v582 = vpack.c.b16 %v581, %v580
        %v585 = vsel %vm388, %v574, 0
        %v588 = vsel %vm388, %v575, 0
        %v591 = vsel %vm388, %v576, 0
        %v594 = vsel %vm388, %v577, 0
        %596 = vmatprep.subr.bf16.mxu0 0
        %597 = vmatpush1.bf16.msra.mxu0 0
        %598 = vmatprep.subr.bf16.mxu0 0
        %599 = vmatpush1.bf16.msra.mxu0 0
        %600 = vmatprep.subr.bf16.mxu0 0
        %601 = vmatpush1.bf16.msra.mxu0 0
        %602 = vmatprep.subr.bf16.mxu0 0
        %603 = vmatpush1.bf16.msra.mxu0 0
        %604 = vmatprep.subr.bf16.mxu0 0
        %605 = vmatpush1.bf16.msra.mxu0 0
        %606 = vmatprep.subr.bf16.mxu0 0
        %607 = vmatpush1.bf16.msra.mxu0 0
        %608 = vmatprep.subr.bf16.mxu0 0
        %609 = vmatpush1.bf16.msra.mxu0 0
        %610 = vmatprep.subr.bf16.mxu0 0
        %611 = vmatpush1.bf16.msra.mxu0 %v582
        %612 = vmatprep.subr.bf16.mxu0 0
        %613 = vmatpush2.bf16.msra.mxu0 0
        %614 = vmatprep.subr.bf16.mxu0 0
        %615 = vmatpush2.bf16.msra.mxu0 0
        %616 = vmatprep.subr.bf16.mxu0 0
        %617 = vmatpush2.bf16.msra.mxu0 0
        %618 = vmatprep.subr.bf16.mxu0 0
        %619 = vmatpush2.bf16.msra.mxu0 0
        %620 = vmatprep.subr.bf16.mxu0 0
        %621 = vmatpush2.bf16.msra.mxu0 0
        %622 = vmatprep.subr.bf16.mxu0 0
        %623 = vmatpush2.bf16.msra.mxu0 0
        %624 = vmatprep.subr.bf16.mxu0 0
        %625 = vmatpush2.bf16.msra.mxu0 0
        %626 = vmatprep.subr.bf16.mxu0 0
        %627 = vmatpush2.bf16.msra.mxu0 0
        %628 = vmatprep.mubr.bf16.mxu0 0
        %629 = vmatmul.mubr.bf16.gmra.mxu0 %v585
        %v630 = vpop.f32.mrf.mxu0
        %v631 = vadd.f32 0.0, %v630
        %v632 = vpop.f32.mrf.mxu0
        %v633 = vpop.f32.mrf.mxu0
        %v634 = vadd.f32 0.0, %v633
        %v635 = vpop.f32.mrf.mxu0
        %636 = vmatprep.mubr.bf16.mxu0 0
        %637 = vmatmul.mubr.bf16.gmra.mxu0 %v588
        %v638 = vpop.f32.mrf.mxu0
        %v639 = vadd.f32 0.0, %v638
        %v640 = vpop.f32.mrf.mxu0
        %v641 = vpop.f32.mrf.mxu0
        %v642 = vadd.f32 0.0, %v641
        %v643 = vpop.f32.mrf.mxu0
        %644 = vmatprep.mubr.bf16.mxu0 0
        %645 = vmatmul.mubr.bf16.gmra.mxu0 %v591
        %v646 = vpop.f32.mrf.mxu0
        %v647 = vadd.f32 0.0, %v646
        %v648 = vpop.f32.mrf.mxu0
        %v649 = vpop.f32.mrf.mxu0
        %v650 = vadd.f32 0.0, %v649
        %v651 = vpop.f32.mrf.mxu0
        %652 = vmatprep.mubr.bf16.mxu0 0
        %653 = vmatmul.mubr.bf16.gmra.mxu0 %v594
        %v654 = vpop.f32.mrf.mxu0
        %v655 = vadd.f32 0.0, %v654
        %v656 = vpop.f32.mrf.mxu0
        %v657 = vpop.f32.mrf.mxu0
        %v658 = vadd.f32 0.0, %v657
        %v659 = vpop.f32.mrf.mxu0
        %660 = vdwg.mxu0
        %v661 = vadd.f32 %v539, %v631
        %v662 = vadd.f32 %v542, %v634
        %v663 = vadd.f32 %v547, %v639
        %v664 = vadd.f32 %v550, %v642
        %v665 = vadd.f32 %v555, %v647
        %v666 = vadd.f32 %v558, %v650
        %v667 = vadd.f32 %v563, %v655
        %v668 = vadd.f32 %v566, %v658
        %v670 = vshrl.u32 %v248, 16
        %v672 = vrot.slane %v670, 4
        %v673 = vshll.u32 %v248, 16
        %v675 = vrot.slane %v673, 5
        %v676 = vor.u32 %v672, %v675
        %v677 = vrot.slane %v676, 4
        %v679 = vshll.u32 %v249, 16
        %v681 = vrot.slane %v679, 5
        %v682 = vsel %vm254, %v677, %v681
        %s683 = scalar_lea.vmem %s1, 24
        %v684 = vld [vmem:[%s683] sm:$0xf]
        %v685 = vld [vmem:[%s683 + $0x4] sm:$0xf]
        %v686 = vunpack.c.l.b16 %v682
        %v687 = vpack.c.b16 %v372, %v371
        %v688 = vpack.c.b16 %v374, %v373
        %v689 = vpack.c.b16 %v376, %v375
        %v690 = vpack.c.b16 %v686, %v377
        %v693 = vunpack.c.l.b16 %v684
        %v694 = vunpack.c.l.b16 %v685
        %v695 = vpack.c.b16 %v694, %v693
        %v698 = vsel %vm388, %v687, 0
        %v701 = vsel %vm388, %v688, 0
        %v704 = vsel %vm388, %v689, 0
        %v707 = vsel %vm388, %v690, 0
        %709 = vmatprep.subr.bf16.mxu0 0
        %710 = vmatpush1.bf16.msra.mxu0 0
        %711 = vmatprep.subr.bf16.mxu0 0
        %712 = vmatpush1.bf16.msra.mxu0 0
        %713 = vmatprep.subr.bf16.mxu0 0
        %714 = vmatpush1.bf16.msra.mxu0 0
        %715 = vmatprep.subr.bf16.mxu0 0
        %716 = vmatpush1.bf16.msra.mxu0 0
        %717 = vmatprep.subr.bf16.mxu0 0
        %718 = vmatpush1.bf16.msra.mxu0 0
        %719 = vmatprep.subr.bf16.mxu0 0
        %720 = vmatpush1.bf16.msra.mxu0 0
        %721 = vmatprep.subr.bf16.mxu0 0
        %722 = vmatpush1.bf16.msra.mxu0 0
        %723 = vmatprep.subr.bf16.mxu0 0
        %724 = vmatpush1.bf16.msra.mxu0 %v695
        %725 = vmatprep.subr.bf16.mxu0 0
        %726 = vmatpush2.bf16.msra.mxu0 0
        %727 = vmatprep.subr.bf16.mxu0 0
        %728 = vmatpush2.bf16.msra.mxu0 0
        %729 = vmatprep.subr.bf16.mxu0 0
        %730 = vmatpush2.bf16.msra.mxu0 0
        %731 = vmatprep.subr.bf16.mxu0 0
        %732 = vmatpush2.bf16.msra.mxu0 0
        %733 = vmatprep.subr.bf16.mxu0 0
        %734 = vmatpush2.bf16.msra.mxu0 0
        %735 = vmatprep.subr.bf16.mxu0 0
        %736 = vmatpush2.bf16.msra.mxu0 0
        %737 = vmatprep.subr.bf16.mxu0 0
        %738 = vmatpush2.bf16.msra.mxu0 0
        %739 = vmatprep.subr.bf16.mxu0 0
        %740 = vmatpush2.bf16.msra.mxu0 0
        %741 = vmatprep.mubr.bf16.mxu0 0
        %742 = vmatmul.mubr.bf16.gmra.mxu0 %v698
        %v743 = vpop.f32.mrf.mxu0
        %v744 = vadd.f32 0.0, %v743
        %v745 = vpop.f32.mrf.mxu0
        %v746 = vpop.f32.mrf.mxu0
        %v747 = vadd.f32 0.0, %v746
        %v748 = vpop.f32.mrf.mxu0
        %749 = vmatprep.mubr.bf16.mxu0 0
        %750 = vmatmul.mubr.bf16.gmra.mxu0 %v701
        %v751 = vpop.f32.mrf.mxu0
        %v752 = vadd.f32 0.0, %v751
        %v753 = vpop.f32.mrf.mxu0
        %v754 = vpop.f32.mrf.mxu0
        %v755 = vadd.f32 0.0, %v754
        %v756 = vpop.f32.mrf.mxu0
        %757 = vmatprep.mubr.bf16.mxu0 0
        %758 = vmatmul.mubr.bf16.gmra.mxu0 %v704
        %v759 = vpop.f32.mrf.mxu0
        %v760 = vadd.f32 0.0, %v759
        %v761 = vpop.f32.mrf.mxu0
        %v762 = vpop.f32.mrf.mxu0
        %v763 = vadd.f32 0.0, %v762
        %v764 = vpop.f32.mrf.mxu0
        %765 = vmatprep.mubr.bf16.mxu0 0
        %766 = vmatmul.mubr.bf16.gmra.mxu0 %v707
        %v767 = vpop.f32.mrf.mxu0
        %v768 = vadd.f32 0.0, %v767
        %v769 = vpop.f32.mrf.mxu0
        %v770 = vpop.f32.mrf.mxu0
        %v771 = vadd.f32 0.0, %v770
        %v772 = vpop.f32.mrf.mxu0
        %773 = vdwg.mxu0
        %v774 = vadd.f32 %v661, %v744
        %v775 = vadd.f32 %v662, %v747
        %v776 = vadd.f32 %v663, %v752
        %v777 = vadd.f32 %v664, %v755
        %v778 = vadd.f32 %v665, %v760
        %v779 = vadd.f32 %v666, %v763
        %v780 = vadd.f32 %v667, %v768
        %v781 = vadd.f32 %v668, %v771
        %782 = vst [vmem:[%s208] sm:$0xff] %v774
        %783 = vst [vmem:[%s208 + $0x8] sm:$0xff] %v775
        %784 = vst [vmem:[%s208 + $0x10] sm:$0xff] %v776
        %785 = vst [vmem:[%s208 + $0x18] sm:$0xff] %v777
        %786 = vst [vmem:[%s208 + $0x20] sm:$0xff] %v778
        %787 = vst [vmem:[%s208 + $0x28] sm:$0xff] %v779
        %788 = vst [vmem:[%s208 + $0x30] sm:$0xff] %v780
        %789 = vst [vmem:[%s208 + $0x38] sm:$0xff] %v781
        %p790 = scmp.eq.s32.totalorder %s27, 0
        // Predicated region
        $region29: #{tpu_custom_call.1} parent=27 // pred_check
          %p791 = pneg %p790
        $region30: #{tpu_custom_call.1} parent=27 // pred_check_branch
          %793 = sbr.rel (%p791) target = $region32
        $region31: #{tpu_custom_call.1} parent=27 // pred_region
          %794 = vst [vmem:[%s214] sm:$0x1] 0.0
          %795 = vst [vmem:[%s220] sm:$0x1] 0.0
        $region32: #{tpu_custom_call.1} parent=27 // pred_fallthru
          _
        %v796 = vld [vmem:[%s214] sm:$0x1]
        %v797 = vadd.f32 %v774, %v775
        %v798 = vadd.f32 %v797, %v776
        %v799 = vadd.f32 %v798, %v777
        %v800 = vadd.f32 %v799, %v778
        %v801 = vadd.f32 %v800, %v779
        %v802 = vadd.f32 %v801, %v780
        %v803 = vadd.f32 %v802, %v781
        %v804 = vrot.slane %v803, 4
        %v805 = vadd.f32 %v803, %v804
        %v806 = vrot.slane %v805, 2
        %v807 = vadd.f32 %v805, %v806
        %v808 = vrot.slane %v807, 1
        %v809 = vadd.f32 %v807, %v808
        %v810 = vadd.f32 %v796, %v809
        %811 = vst [vmem:[%s214] sm:$0x1] %v810
        %v812 = vld [vmem:[%s220] sm:$0x1]
        %v813 = vmul.f32 %v774, %v774
        %v814 = vmul.f32 %v775, %v775
        %v815 = vmul.f32 %v776, %v776
        %v816 = vmul.f32 %v777, %v777
        %v817 = vmul.f32 %v778, %v778
        %v818 = vmul.f32 %v779, %v779
        %v819 = vmul.f32 %v780, %v780
        %v820 = vmul.f32 %v781, %v781
        %v821 = vadd.f32 %v813, %v814
        %v822 = vadd.f32 %v821, %v815
        %v823 = vadd.f32 %v822, %v816
        %v824 = vadd.f32 %v823, %v817
        %v825 = vadd.f32 %v824, %v818
        %v826 = vadd.f32 %v825, %v819
        %v827 = vadd.f32 %v826, %v820
        %v828 = vrot.slane %v827, 4
        %v829 = vadd.f32 %v827, %v828
        %v830 = vrot.slane %v829, 2
        %v831 = vadd.f32 %v829, %v830
        %v832 = vrot.slane %v831, 1
        %v833 = vadd.f32 %v831, %v832
        %v834 = vadd.f32 %v812, %v833
        %835 = vst [vmem:[%s220] sm:$0x1] %v834
        %s836 = sand.u32 %s91, 1
        %s837 = scalar_lea.sflag [#allocation3], %s836
        %s838 = sand.u32 %s91, 1
        %s839 = smul.addr %s838, 64
        %s840 = scalar_lea.vmem [#allocation2], %s839
        %s841 = sand.u32 %s22, 1
        %s842 = scalar_lea.sflag [#allocation5], %s841
        %s843 = sand.u32 %s117, 1
        %s844 = scalar_lea.vmem [#allocation4], %s843
        %s845 = sand.u32 %s22, 1
        %s846 = scalar_lea.sflag [#allocation5], %s845
        %s847 = sand.u32 %s143, 1
        %s848 = scalar_lea.vmem [#allocation6], %s847
        // Predicated region
        $region33: #{tpu_custom_call.1} parent=27 // pred_check
          %p849 = pneg %p101
        $region34: #{tpu_custom_call.1} parent=27 // pred_check_branch
          %851 = sbr.rel (%p849) target = $region36
        $region35: #{tpu_custom_call.1} parent=27 // pred_region
          %s852 = smul.u32 8, %s27
          %s854 = ssub.s32 1024, 1024
          %855 = vsyncadd %s837, %s854
          %s856 = smul.addr %s26, 8
          %s857 = sadd.s32 %s852, %s856
          %s858 = smul.addr %s857, 128
          %s859 = scalar_lea.hbm %s2, %s858
          %s860 = sshll.u32 %s840, 4
          %s861 = int_to_ptr.vmem [resolvable:$true] %s860
          %866 = dma.vmem_to_hbm [thread:$0]  %s861, 1024, %s859, %s837, 128, 128, 8
        $region36: #{tpu_custom_call.1} parent=27 // pred_fallthru
          _
        // Predicated region
        $region37: #{tpu_custom_call.1} parent=27 // pred_check
          %p867 = pneg %p127
        $region38: #{tpu_custom_call.1} parent=27 // pred_check_branch
          %869 = sbr.rel (%p867) target = $region40
        $region39: #{tpu_custom_call.1} parent=27 // pred_region
          %s871 = ssub.s32 16, 16
          %872 = vsyncadd %s842, %s871
          %s873 = smul.addr %s26, 16
          %s874 = scalar_lea.hbm %s3, %s873
          %s876 = sshll.u32 %s844, 4
          %s877 = int_to_ptr.vmem [resolvable:$true] %s876
          %879 = dma.vmem_to_hbm [thread:$0]  %s877, 16, %s874, %s842
        $region40: #{tpu_custom_call.1} parent=27 // pred_fallthru
          _
        // Predicated region
        $region41: #{tpu_custom_call.1} parent=27 // pred_check
          %p880 = pneg %p153
        $region42: #{tpu_custom_call.1} parent=27 // pred_check_branch
          %882 = sbr.rel (%p880) target = $region44
        $region43: #{tpu_custom_call.1} parent=27 // pred_region
          %s884 = ssub.s32 16, 16
          %885 = vsyncadd %s846, %s884
          %s886 = smul.addr %s26, 16
          %s887 = scalar_lea.hbm %s4, %s886
          %s889 = sshll.u32 %s848, 4
          %s890 = int_to_ptr.vmem [resolvable:$true] %s889
          %892 = dma.vmem_to_hbm [thread:$0]  %s890, 16, %s887, %s846
        $region44: #{tpu_custom_call.1} parent=27 // pred_fallthru
          _
      $region28: #{tpu_custom_call.1} parent=5 // pred_fallthru
        _
      %p893 = scmp.le.s32.totalorder 2, %s17
      // Predicated region
      $region45: #{tpu_custom_call.1} parent=5 // pred_check
        %p894 = pneg %p893
      $region46: #{tpu_custom_call.1} parent=5 // pred_check_branch
        %896 = sbr.rel (%p894) target = $region48
      $region47: #{tpu_custom_call.1} parent=5 // pred_region
        %s897 = ssub.s32 %s17, 2
        // Predicated region
        $region49: #{tpu_custom_call.1} parent=47 // pred_check
          %p898 = pneg %p107
        $region50: #{tpu_custom_call.1} parent=47 // pred_check_branch
          %900 = sbr.rel (%p898) target = $region52
        $region51: #{tpu_custom_call.1} parent=47 // pred_region
          %s901 = sand.u32 %s92, 1
          %s902 = scalar_lea.sflag [#allocation3], %s901
          %s903 = sand.u32 %s92, 1
          %s904 = smul.addr %s903, 64
          %s905 = scalar_lea.vmem [#allocation2], %s904
          %906 = dma.done %s902, 1024
        $region52: #{tpu_custom_call.1} parent=47 // pred_fallthru
          _
        // Predicated region
        $region53: #{tpu_custom_call.1} parent=47 // pred_check
          %p907 = pneg %p133
        $region54: #{tpu_custom_call.1} parent=47 // pred_check_branch
          %909 = sbr.rel (%p907) target = $region56
        $region55: #{tpu_custom_call.1} parent=47 // pred_region
          %s910 = sand.u32 %s23, 1
          %s911 = scalar_lea.sflag [#allocation5], %s910
          %s912 = sand.u32 %s118, 1
          %s913 = scalar_lea.vmem [#allocation4], %s912
          %914 = dma.done %s911, 16
        $region56: #{tpu_custom_call.1} parent=47 // pred_fallthru
          _
        // Predicated region
        $region57: #{tpu_custom_call.1} parent=47 // pred_check
          %p915 = pneg %p159
        $region58: #{tpu_custom_call.1} parent=47 // pred_check_branch
          %917 = sbr.rel (%p915) target = $region60
        $region59: #{tpu_custom_call.1} parent=47 // pred_region
          %s918 = sand.u32 %s23, 1
          %s919 = scalar_lea.sflag [#allocation5], %s918
          %s920 = sand.u32 %s144, 1
          %s921 = scalar_lea.vmem [#allocation6], %s920
          %922 = dma.done %s919, 16
        $region60: #{tpu_custom_call.1} parent=47 // pred_fallthru
          _
      $region48: #{tpu_custom_call.1} parent=5 // pred_fallthru
        _
    $region6: #{tpu_custom_call.1} parent=1 // loop_footer
      %s21 = sadd.s32 1, %s17
    $region7: #{tpu_custom_call.1} parent=1 // loop_footer_branch
      %16 = sbr.rel target = $region3
    $region8: #{tpu_custom_call.1} parent=1 // loop_exit
      _
    %923 = vsyncpa [#allocation3], 1
    %s924 = scalar_lea.sflag [#allocation3], 1
    %925 = vsyncpa %s924, 1
    %926 = vsyncpa [#allocation5], 1
    %s927 = scalar_lea.sflag [#allocation5], 1
    %928 = vsyncpa %s927, 1

</llo_original>
